<compile_context>
chip_gen: v6e
topology: v6e:2x2x1
jax: 0.10.0
libtpu: 0.0.40
codegen_flags: <defaults>
</compile_context>

<pallas_src>
import functools

import jax
import jax.numpy as jnp
from jax.experimental import pallas as pl
from jax.experimental.pallas import tpu as pltpu


def _dice_kernel(x_ref, t_ref, inter_ref, psum_ref, tsum_ref, *,
                 num_classes, fold):
    """One (batch, partition, row-tile) grid step.

    x_ref:      (1, C, tr, 128)  logits tile (native dtype, upcast to f32)
    t_ref:      (1, tr, 128)     int32 labels tile
    *_ref out:  (1, C, 8, 128)   f32 accumulators, resident across the inner
                                 ("arbitrary") row-tile axis.
    """
    s = pl.program_id(2)

    @pl.when(s == 0)
    def _():
        inter_ref[...] = jnp.zeros_like(inter_ref)
        psum_ref[...] = jnp.zeros_like(psum_ref)
        tsum_ref[...] = jnp.zeros_like(tsum_ref)

    t = t_ref[0]                                                  # (tr, 128)
    xs = [x_ref[0, c].astype(jnp.float32) for c in range(num_classes)]

    # Numerically-stable softmax over the class axis, expressed as unrolled
    # elementwise ops over per-class (tr, 128) slabs: every vreg is fully
    # packed and there are no cross-sublane (XLU) reductions in steady state.
    m = xs[0]
    for c in range(1, num_classes):
        m = jnp.maximum(m, xs[c])
    es = [jnp.exp(xs[c] - m) for c in range(num_classes)]
    denom = es[0]
    for c in range(1, num_classes):
        denom = denom + es[c]
    inv = pl.reciprocal(denom, approx=False)                      # (tr, 128)

    for c in range(num_classes):
        p_c = es[c] * inv                                         # (tr, 128)
        hit = t == c                                              # bool
        inter_ref[0, c] += fold(jnp.where(hit, p_c, 0.0))
        psum_ref[0, c] += fold(p_c)
        tsum_ref[0, c] += fold(jnp.where(hit, 1.0, 0.0))


def _round_up(x, m):
    return ((x + m - 1) // m) * m


def _num_tensorcores():
    """Best-effort TensorCore count (2 on v7x-style chips, else 1)."""
    get_info = getattr(pltpu, "get_tpu_info", None)
    if get_info is None:
        return 1
    try:
        info = get_info()
    except Exception:
        return 1
    for attr in ("num_cores", "core_count", "num_tensorcores", "tensorcore_count"):
        v = getattr(info, attr, None)
        if isinstance(v, int) and 0 < v <= 8:
            return v
    return 1


def _choose_row_tile(rows, target_rows):
    """Pick a sublane tile `tr` (multiple of 8) that divides `rows`."""
    if rows <= target_rows:
        return rows
    t = (target_rows // 8) * 8
    while t > 8:
        if rows % t == 0:
            return t
        t -= 8
    return 8


def dice_loss(logits_nchw, targets, *, num_classes=5, smooth=1.0,
              target_rows=1024, num_partitions=None):
    """Pallas-backed multi-class soft Dice loss (matches PyTorch DiceLoss.forward)."""
    N, C, H, W = logits_nchw.shape
    assert C == num_classes, "channel dim must equal num_classes"
    Mn = H * W
    # Pad the per-image pixel count to a multiple of 8*128 so every row-tile
    # is a full (8,128)-aligned slab.  Only non-multiple-of-1024 image sizes
    # pay this (small) copy; the common sizes are already aligned.
    Mp = _round_up(Mn, 8 * 128)

    x = logits_nchw.reshape(N, C, Mn)                   # free, contiguous view
    t = targets.reshape(N, Mn).astype(jnp.int32)
    if Mp != Mn:
        # Zero-logit pad pixels add exactly softmax(0) = 1/C to every class's
        # psum (corrected in the wrapper below); the out-of-range pad label
        # keeps the one-hot terms (inter / tsum) at zero.
        x = jnp.pad(x, ((0, 0), (0, 0), (0, Mp - Mn)))
        t = jnp.pad(t, ((0, 0), (0, Mp - Mn)), constant_values=num_classes)

    R = Mp // 128                                       # rows of 128 pixels
    x = x.reshape(N, C, R, 128)                         # free reshape, no transpose
    t = t.reshape(N, R, 128)

    tr = _choose_row_tile(R, max(8, (target_rows // 8) * 8))
    S = R // tr                                         # row-tiles per image

    # Partition the row-tiles across TensorCores (only when it divides evenly).
    ncores = _num_tensorcores() if num_partitions is None else max(1, num_partitions)
    p_eff = 1
    for d in range(min(ncores, S), 0, -1):
        if S % d == 0:
            p_eff = d
            break
    sp = S // p_eff

    # Fold a (tr, 128) partial into one (8, 128) vreg: tile-aligned reshape
    # (free) + per-vreg adds (VALU only, no XLU).
    if tr == 8:
        fold = lambda v: v
    else:
        fold = lambda v: v.reshape(tr // 8, 8, 128).sum(axis=0)

    kernel = functools.partial(_dice_kernel, num_classes=C, fold=fold)

    out_sds = jax.ShapeDtypeStruct((N * p_eff, C, 8, 128), jnp.float32)
    x_spec = pl.BlockSpec((1, C, tr, 128), lambda n, p, s: (n, 0, p * sp + s, 0))
    t_spec = pl.BlockSpec((1, tr, 128), lambda n, p, s: (n, p * sp + s, 0))
    o_spec = pl.BlockSpec((1, C, 8, 128), lambda n, p, s: (n * p_eff + p, 0, 0, 0))

    # Raise the scoped-VMEM limit only when the chosen tile actually needs it.
    x_block_bytes = C * tr * 128 * logits_nchw.dtype.itemsize
    t_block_bytes = tr * 128 * 4
    out_block_bytes = 3 * C * 8 * 128 * 4
    need = 2 * (x_block_bytes + t_block_bytes) + 2 * out_block_bytes + (1 << 20)
    cp_kwargs = dict(dimension_semantics=("parallel", "parallel", "arbitrary"))
    if need > 16 * 1024 * 1024:
        cp_kwargs["vmem_limit_bytes"] = int(need * 1.5)

    inter_p, psum_p, tsum_p = pl.pallas_call(
        kernel,
        out_shape=(out_sds, out_sds, out_sds),
        grid_spec=pltpu.PrefetchScalarGridSpec(
            num_scalar_prefetch=0,
            grid=(N, p_eff, sp),
            in_specs=[x_spec, t_spec],
            out_specs=[o_spec, o_spec, o_spec],
        ),
        compiler_params=pltpu.CompilerParams(**cp_kwargs),
    )(x, t)

    # Fold the tiny (N*P, C, 8, 128) partials into the scalar loss in JAX.
    inter = jnp.sum(inter_p, axis=(0, 2, 3))            # (C,)
    psum = jnp.sum(psum_p, axis=(0, 2, 3))              # (C,)
    tsum = jnp.sum(tsum_p, axis=(0, 2, 3))              # (C,)
    if Mp != Mn:
        psum = psum - (N * (Mp - Mn)) / num_classes     # remove zero-logit pad
    dice = (2.0 * inter + smooth) / (psum + tsum + smooth)
    return jnp.sum(1.0 - dice) / num_classes


def _reference_dice_loss(logits_nchw, targets, num_classes=5, smooth=1.0):
    p = jax.nn.softmax(logits_nchw, axis=1)
    loss = 0.0
    for c in range(num_classes):
        pc = p[:, c, :, :]
        tc = (targets == c).astype(jnp.float32)
        inter = jnp.sum(pc * tc)
        dice = (2.0 * inter + smooth) / (jnp.sum(pc) + jnp.sum(tc) + smooth)
        loss += 1.0 - dice
    return loss / num_classes


if __name__ == "__main__":
    key = jax.random.PRNGKey(0)
    k1, k2 = jax.random.split(key)

    N, C, H, W = 2, 5, 16, 16  # num_classes = 5 (module default)
    logits = jax.random.normal(k1, (N, C, H, W), dtype=jnp.float32)
    targets = jax.random.randint(k2, (N, H, W), 0, C, dtype=jnp.int32)

    loss = dice_loss(logits, targets, num_classes=C, smooth=1.0)
    loss = jax.block_until_ready(loss)

    ref = _reference_dice_loss(logits, targets, num_classes=C, smooth=1.0)
    assert jnp.allclose(loss, ref, atol=1e-5, rtol=1e-5), (loss, ref)

    print("KERNEL_OK")
</pallas_src>

<mosaic_0001>
module attributes {stable_mosaic.version = 11 : i64} {
  func.func @_dice_kernel(%arg0: i32, %arg1: i32, %arg2: i32, %arg3: memref<1x5x8x128xf32, #tpu.memory_space<vmem>>, %arg4: memref<1x8x128xi32, #tpu.memory_space<vmem>>, %arg5: memref<1x5x8x128xf32, #tpu.memory_space<vmem>>, %arg6: memref<1x5x8x128xf32, #tpu.memory_space<vmem>>, %arg7: memref<1x5x8x128xf32, #tpu.memory_space<vmem>>) attributes {dimension_semantics = [#tpu.dimension_semantics<parallel>, #tpu.dimension_semantics<parallel>, #tpu.dimension_semantics<arbitrary>], iteration_bounds = array<i64: 2, 1, 1>, scalar_prefetch = 0 : i64, scratch_operands = 0 : i64, tpu.core_type = #tpu.core_type<tc>, window_params = [{transform_indices = @transform_0, window_bounds = array<i64: 1, 5, 8, 128>}, {transform_indices = @transform_1, window_bounds = array<i64: 1, 8, 128>}, {transform_indices = @transform_2, window_bounds = array<i64: 1, 5, 8, 128>}, {transform_indices = @transform_3, window_bounds = array<i64: 1, 5, 8, 128>}, {transform_indices = @transform_4, window_bounds = array<i64: 1, 5, 8, 128>}]} {
    %c0_i32 = arith.constant 0 : i32
    %0 = arith.cmpi eq, %arg2, %c0_i32 : i32
    %1 = arith.extui %0 : i1 to i32
    %c0_i32_0 = arith.constant 0 : i32
    %2 = arith.cmpi ne, %1, %c0_i32_0 : i32
    scf.if %2 {
      %cst_154 = arith.constant 0.000000e+00 : f32
      %164 = vector.broadcast %cst_154 : f32 to vector<1x5x8x128xf32>
      %c0_155 = arith.constant 0 : index
      %c0_156 = arith.constant 0 : index
      %c0_157 = arith.constant 0 : index
      %c0_158 = arith.constant 0 : index
      %165 = vector.load %arg5[%c0_155, %c0_156, %c0_157, %c0_158] : memref<1x5x8x128xf32, #tpu.memory_space<vmem>>, vector<1x5x8x128xf32>
      tpu.vector_store %arg5[%c0_155, %c0_156, %c0_157, %c0_158], %164 {strides = array<i32>} : memref<1x5x8x128xf32, #tpu.memory_space<vmem>>, vector<1x5x8x128xf32>,
      %cst_159 = arith.constant 0.000000e+00 : f32
      %166 = vector.broadcast %cst_159 : f32 to vector<1x5x8x128xf32>
      %c0_160 = arith.constant 0 : index
      %c0_161 = arith.constant 0 : index
      %c0_162 = arith.constant 0 : index
      %c0_163 = arith.constant 0 : index
      %167 = vector.load %arg6[%c0_160, %c0_161, %c0_162, %c0_163] : memref<1x5x8x128xf32, #tpu.memory_space<vmem>>, vector<1x5x8x128xf32>
      tpu.vector_store %arg6[%c0_160, %c0_161, %c0_162, %c0_163], %166 {strides = array<i32>} : memref<1x5x8x128xf32, #tpu.memory_space<vmem>>, vector<1x5x8x128xf32>,
      %cst_164 = arith.constant 0.000000e+00 : f32
      %168 = vector.broadcast %cst_164 : f32 to vector<1x5x8x128xf32>
      %c0_165 = arith.constant 0 : index
      %c0_166 = arith.constant 0 : index
      %c0_167 = arith.constant 0 : index
      %c0_168 = arith.constant 0 : index
      %169 = vector.load %arg7[%c0_165, %c0_166, %c0_167, %c0_168] : memref<1x5x8x128xf32, #tpu.memory_space<vmem>>, vector<1x5x8x128xf32>
      tpu.vector_store %arg7[%c0_165, %c0_166, %c0_167, %c0_168], %168 {strides = array<i32>} : memref<1x5x8x128xf32, #tpu.memory_space<vmem>>, vector<1x5x8x128xf32>,
    } else {
    }
    %c0 = arith.constant 0 : index
    %c0_1 = arith.constant 0 : index
    %c0_2 = arith.constant 0 : index
    %3 = vector.load %arg4[%c0, %c0_1, %c0_2] : memref<1x8x128xi32, #tpu.memory_space<vmem>>, vector<1x8x128xi32>
    %4 = vector.shape_cast %3 : vector<1x8x128xi32> to vector<8x128xi32>
    %c0_3 = arith.constant 0 : index
    %c0_4 = arith.constant 0 : index
    %c0_5 = arith.constant 0 : index
    %c0_6 = arith.constant 0 : index
    %5 = vector.load %arg3[%c0_3, %c0_4, %c0_5, %c0_6] : memref<1x5x8x128xf32, #tpu.memory_space<vmem>>, vector<1x1x8x128xf32>
    %6 = vector.shape_cast %5 : vector<1x1x8x128xf32> to vector<8x128xf32>
    %c0_7 = arith.constant 0 : index
    %c1 = arith.constant 1 : index
    %c0_8 = arith.constant 0 : index
    %c0_9 = arith.constant 0 : index
    %7 = vector.load %arg3[%c0_7, %c1, %c0_8, %c0_9] : memref<1x5x8x128xf32, #tpu.memory_space<vmem>>, vector<1x1x8x128xf32>
    %8 = vector.shape_cast %7 : vector<1x1x8x128xf32> to vector<8x128xf32>
    %c0_10 = arith.constant 0 : index
    %c2 = arith.constant 2 : index
    %c0_11 = arith.constant 0 : index
    %c0_12 = arith.constant 0 : index
    %9 = vector.load %arg3[%c0_10, %c2, %c0_11, %c0_12] : memref<1x5x8x128xf32, #tpu.memory_space<vmem>>, vector<1x1x8x128xf32>
    %10 = vector.shape_cast %9 : vector<1x1x8x128xf32> to vector<8x128xf32>
    %c0_13 = arith.constant 0 : index
    %c3 = arith.constant 3 : index
    %c0_14 = arith.constant 0 : index
    %c0_15 = arith.constant 0 : index
    %11 = vector.load %arg3[%c0_13, %c3, %c0_14, %c0_15] : memref<1x5x8x128xf32, #tpu.memory_space<vmem>>, vector<1x1x8x128xf32>
    %12 = vector.shape_cast %11 : vector<1x1x8x128xf32> to vector<8x128xf32>
    %c0_16 = arith.constant 0 : index
    %c4 = arith.constant 4 : index
    %c0_17 = arith.constant 0 : index
    %c0_18 = arith.constant 0 : index
    %13 = vector.load %arg3[%c0_16, %c4, %c0_17, %c0_18] : memref<1x5x8x128xf32, #tpu.memory_space<vmem>>, vector<1x1x8x128xf32>
    %14 = vector.shape_cast %13 : vector<1x1x8x128xf32> to vector<8x128xf32>
    %15 = arith.maximumf %6, %8 : vector<8x128xf32>
    %16 = arith.maximumf %15, %10 : vector<8x128xf32>
    %17 = arith.maximumf %16, %12 : vector<8x128xf32>
    %18 = arith.maximumf %17, %14 : vector<8x128xf32>
    %19 = arith.subf %6, %18 : vector<8x128xf32>
    %20 = math.exp %19 : vector<8x128xf32>
    %21 = arith.subf %8, %18 : vector<8x128xf32>
    %22 = math.exp %21 : vector<8x128xf32>
    %23 = arith.subf %10, %18 : vector<8x128xf32>
    %24 = math.exp %23 : vector<8x128xf32>
    %25 = arith.subf %12, %18 : vector<8x128xf32>
    %26 = math.exp %25 : vector<8x128xf32>
    %27 = arith.subf %14, %18 : vector<8x128xf32>
    %28 = math.exp %27 : vector<8x128xf32>
    %29 = arith.addf %20, %22 : vector<8x128xf32>
    %30 = arith.addf %29, %24 : vector<8x128xf32>
    %31 = arith.addf %30, %26 : vector<8x128xf32>
    %32 = arith.addf %31, %28 : vector<8x128xf32>
    %33 = tpu.reciprocal %32 : vector<8x128xf32> -> vector<8x128xf32>
    %34 = arith.mulf %20, %33 : vector<8x128xf32>
    %c0_i32_19 = arith.constant 0 : i32
    %35 = vector.broadcast %c0_i32_19 : i32 to vector<8x128xi32>
    %36 = arith.cmpi eq, %4, %35 : vector<8x128xi32>
    %c0_20 = arith.constant 0 : index
    %c0_21 = arith.constant 0 : index
    %c0_22 = arith.constant 0 : index
    %c0_23 = arith.constant 0 : index
    %37 = vector.load %arg5[%c0_20, %c0_21, %c0_22, %c0_23] : memref<1x5x8x128xf32, #tpu.memory_space<vmem>>, vector<1x1x8x128xf32>
    %38 = vector.shape_cast %37 : vector<1x1x8x128xf32> to vector<8x128xf32>
    %cst = arith.constant 0.000000e+00 : f32
    %39 = vector.broadcast %cst : f32 to vector<8x128xf32>
    %40 = arith.select %36, %34, %39 : vector<8x128xi1>, vector<8x128xf32>
    %41 = arith.addf %38, %40 : vector<8x128xf32>
    %c0_24 = arith.constant 0 : index
    %c0_25 = arith.constant 0 : index
    %c0_26 = arith.constant 0 : index
    %c0_27 = arith.constant 0 : index
    %42 = vector.load %arg5[%c0_24, %c0_25, %c0_26, %c0_27] : memref<1x5x8x128xf32, #tpu.memory_space<vmem>>, vector<1x1x8x128xf32>
    %43 = vector.shape_cast %42 : vector<1x1x8x128xf32> to vector<8x128xf32>
    %44 = vector.shape_cast %41 : vector<8x128xf32> to vector<1x1x8x128xf32>
    tpu.vector_store %arg5[%c0_24, %c0_25, %c0_26, %c0_27], %44 {strides = array<i32>} : memref<1x5x8x128xf32, #tpu.memory_space<vmem>>, vector<1x1x8x128xf32>,
    %c0_28 = arith.constant 0 : index
    %c0_29 = arith.constant 0 : index
    %c0_30 = arith.constant 0 : index
    %c0_31 = arith.constant 0 : index
    %45 = vector.load %arg6[%c0_28, %c0_29, %c0_30, %c0_31] : memref<1x5x8x128xf32, #tpu.memory_space<vmem>>, vector<1x1x8x128xf32>
    %46 = vector.shape_cast %45 : vector<1x1x8x128xf32> to vector<8x128xf32>
    %47 = arith.addf %46, %34 : vector<8x128xf32>
    %c0_32 = arith.constant 0 : index
    %c0_33 = arith.constant 0 : index
    %c0_34 = arith.constant 0 : index
    %c0_35 = arith.constant 0 : index
    %48 = vector.load %arg6[%c0_32, %c0_33, %c0_34, %c0_35] : memref<1x5x8x128xf32, #tpu.memory_space<vmem>>, vector<1x1x8x128xf32>
    %49 = vector.shape_cast %48 : vector<1x1x8x128xf32> to vector<8x128xf32>
    %50 = vector.shape_cast %47 : vector<8x128xf32> to vector<1x1x8x128xf32>
    tpu.vector_store %arg6[%c0_32, %c0_33, %c0_34, %c0_35], %50 {strides = array<i32>} : memref<1x5x8x128xf32, #tpu.memory_space<vmem>>, vector<1x1x8x128xf32>,
    %c0_36 = arith.constant 0 : index
    %c0_37 = arith.constant 0 : index
    %c0_38 = arith.constant 0 : index
    %c0_39 = arith.constant 0 : index
    %51 = vector.load %arg7[%c0_36, %c0_37, %c0_38, %c0_39] : memref<1x5x8x128xf32, #tpu.memory_space<vmem>>, vector<1x1x8x128xf32>
    %52 = vector.shape_cast %51 : vector<1x1x8x128xf32> to vector<8x128xf32>
    %cst_40 = arith.constant 1.000000e+00 : f32
    %cst_41 = arith.constant 0.000000e+00 : f32
    %53 = vector.broadcast %cst_40 : f32 to vector<8x128xf32>
    %54 = vector.broadcast %cst_41 : f32 to vector<8x128xf32>
    %55 = arith.select %36, %53, %54 : vector<8x128xi1>, vector<8x128xf32>
    %56 = arith.addf %52, %55 : vector<8x128xf32>
    %c0_42 = arith.constant 0 : index
    %c0_43 = arith.constant 0 : index
    %c0_44 = arith.constant 0 : index
    %c0_45 = arith.constant 0 : index
    %57 = vector.load %arg7[%c0_42, %c0_43, %c0_44, %c0_45] : memref<1x5x8x128xf32, #tpu.memory_space<vmem>>, vector<1x1x8x128xf32>
    %58 = vector.shape_cast %57 : vector<1x1x8x128xf32> to vector<8x128xf32>
    %59 = vector.shape_cast %56 : vector<8x128xf32> to vector<1x1x8x128xf32>
    tpu.vector_store %arg7[%c0_42, %c0_43, %c0_44, %c0_45], %59 {strides = array<i32>} : memref<1x5x8x128xf32, #tpu.memory_space<vmem>>, vector<1x1x8x128xf32>,
    %60 = arith.mulf %22, %33 : vector<8x128xf32>
    %c1_i32 = arith.constant 1 : i32
    %61 = vector.broadcast %c1_i32 : i32 to vector<8x128xi32>
    %62 = arith.cmpi eq, %4, %61 : vector<8x128xi32>
    %c0_46 = arith.constant 0 : index
    %c1_47 = arith.constant 1 : index
    %c0_48 = arith.constant 0 : index
    %c0_49 = arith.constant 0 : index
    %63 = vector.load %arg5[%c0_46, %c1_47, %c0_48, %c0_49] : memref<1x5x8x128xf32, #tpu.memory_space<vmem>>, vector<1x1x8x128xf32>
    %64 = vector.shape_cast %63 : vector<1x1x8x128xf32> to vector<8x128xf32>
    %cst_50 = arith.constant 0.000000e+00 : f32
    %65 = vector.broadcast %cst_50 : f32 to vector<8x128xf32>
    %66 = arith.select %62, %60, %65 : vector<8x128xi1>, vector<8x128xf32>
    %67 = arith.addf %64, %66 : vector<8x128xf32>
    %c0_51 = arith.constant 0 : index
    %c1_52 = arith.constant 1 : index
    %c0_53 = arith.constant 0 : index
    %c0_54 = arith.constant 0 : index
    %68 = vector.load %arg5[%c0_51, %c1_52, %c0_53, %c0_54] : memref<1x5x8x128xf32, #tpu.memory_space<vmem>>, vector<1x1x8x128xf32>
    %69 = vector.shape_cast %68 : vector<1x1x8x128xf32> to vector<8x128xf32>
    %70 = vector.shape_cast %67 : vector<8x128xf32> to vector<1x1x8x128xf32>
    tpu.vector_store %arg5[%c0_51, %c1_52, %c0_53, %c0_54], %70 {strides = array<i32>} : memref<1x5x8x128xf32, #tpu.memory_space<vmem>>, vector<1x1x8x128xf32>,
    %c0_55 = arith.constant 0 : index
    %c1_56 = arith.constant 1 : index
    %c0_57 = arith.constant 0 : index
    %c0_58 = arith.constant 0 : index
    %71 = vector.load %arg6[%c0_55, %c1_56, %c0_57, %c0_58] : memref<1x5x8x128xf32, #tpu.memory_space<vmem>>, vector<1x1x8x128xf32>
    %72 = vector.shape_cast %71 : vector<1x1x8x128xf32> to vector<8x128xf32>
    %73 = arith.addf %72, %60 : vector<8x128xf32>
    %c0_59 = arith.constant 0 : index
    %c1_60 = arith.constant 1 : index
    %c0_61 = arith.constant 0 : index
    %c0_62 = arith.constant 0 : index
    %74 = vector.load %arg6[%c0_59, %c1_60, %c0_61, %c0_62] : memref<1x5x8x128xf32, #tpu.memory_space<vmem>>, vector<1x1x8x128xf32>
    %75 = vector.shape_cast %74 : vector<1x1x8x128xf32> to vector<8x128xf32>
    %76 = vector.shape_cast %73 : vector<8x128xf32> to vector<1x1x8x128xf32>
    tpu.vector_store %arg6[%c0_59, %c1_60, %c0_61, %c0_62], %76 {strides = array<i32>} : memref<1x5x8x128xf32, #tpu.memory_space<vmem>>, vector<1x1x8x128xf32>,
    %c0_63 = arith.constant 0 : index
    %c1_64 = arith.constant 1 : index
    %c0_65 = arith.constant 0 : index
    %c0_66 = arith.constant 0 : index
    %77 = vector.load %arg7[%c0_63, %c1_64, %c0_65, %c0_66] : memref<1x5x8x128xf32, #tpu.memory_space<vmem>>, vector<1x1x8x128xf32>
    %78 = vector.shape_cast %77 : vector<1x1x8x128xf32> to vector<8x128xf32>
    %cst_67 = arith.constant 1.000000e+00 : f32
    %cst_68 = arith.constant 0.000000e+00 : f32
    %79 = vector.broadcast %cst_67 : f32 to vector<8x128xf32>
    %80 = vector.broadcast %cst_68 : f32 to vector<8x128xf32>
    %81 = arith.select %62, %79, %80 : vector<8x128xi1>, vector<8x128xf32>
    %82 = arith.addf %78, %81 : vector<8x128xf32>
    %c0_69 = arith.constant 0 : index
    %c1_70 = arith.constant 1 : index
    %c0_71 = arith.constant 0 : index
    %c0_72 = arith.constant 0 : index
    %83 = vector.load %arg7[%c0_69, %c1_70, %c0_71, %c0_72] : memref<1x5x8x128xf32, #tpu.memory_space<vmem>>, vector<1x1x8x128xf32>
    %84 = vector.shape_cast %83 : vector<1x1x8x128xf32> to vector<8x128xf32>
    %85 = vector.shape_cast %82 : vector<8x128xf32> to vector<1x1x8x128xf32>
    tpu.vector_store %arg7[%c0_69, %c1_70, %c0_71, %c0_72], %85 {strides = array<i32>} : memref<1x5x8x128xf32, #tpu.memory_space<vmem>>, vector<1x1x8x128xf32>,
    %86 = arith.mulf %24, %33 : vector<8x128xf32>
    %c2_i32 = arith.constant 2 : i32
    %87 = vector.broadcast %c2_i32 : i32 to vector<8x128xi32>
    %88 = arith.cmpi eq, %4, %87 : vector<8x128xi32>
    %c0_73 = arith.constant 0 : index
    %c2_74 = arith.constant 2 : index
    %c0_75 = arith.constant 0 : index
    %c0_76 = arith.constant 0 : index
    %89 = vector.load %arg5[%c0_73, %c2_74, %c0_75, %c0_76] : memref<1x5x8x128xf32, #tpu.memory_space<vmem>>, vector<1x1x8x128xf32>
    %90 = vector.shape_cast %89 : vector<1x1x8x128xf32> to vector<8x128xf32>
    %cst_77 = arith.constant 0.000000e+00 : f32
    %91 = vector.broadcast %cst_77 : f32 to vector<8x128xf32>
    %92 = arith.select %88, %86, %91 : vector<8x128xi1>, vector<8x128xf32>
    %93 = arith.addf %90, %92 : vector<8x128xf32>
    %c0_78 = arith.constant 0 : index
    %c2_79 = arith.constant 2 : index
    %c0_80 = arith.constant 0 : index
    %c0_81 = arith.constant 0 : index
    %94 = vector.load %arg5[%c0_78, %c2_79, %c0_80, %c0_81] : memref<1x5x8x128xf32, #tpu.memory_space<vmem>>, vector<1x1x8x128xf32>
    %95 = vector.shape_cast %94 : vector<1x1x8x128xf32> to vector<8x128xf32>
    %96 = vector.shape_cast %93 : vector<8x128xf32> to vector<1x1x8x128xf32>
    tpu.vector_store %arg5[%c0_78, %c2_79, %c0_80, %c0_81], %96 {strides = array<i32>} : memref<1x5x8x128xf32, #tpu.memory_space<vmem>>, vector<1x1x8x128xf32>,
    %c0_82 = arith.constant 0 : index
    %c2_83 = arith.constant 2 : index
    %c0_84 = arith.constant 0 : index
    %c0_85 = arith.constant 0 : index
    %97 = vector.load %arg6[%c0_82, %c2_83, %c0_84, %c0_85] : memref<1x5x8x128xf32, #tpu.memory_space<vmem>>, vector<1x1x8x128xf32>
    %98 = vector.shape_cast %97 : vector<1x1x8x128xf32> to vector<8x128xf32>
    %99 = arith.addf %98, %86 : vector<8x128xf32>
    %c0_86 = arith.constant 0 : index
    %c2_87 = arith.constant 2 : index
    %c0_88 = arith.constant 0 : index
    %c0_89 = arith.constant 0 : index
    %100 = vector.load %arg6[%c0_86, %c2_87, %c0_88, %c0_89] : memref<1x5x8x128xf32, #tpu.memory_space<vmem>>, vector<1x1x8x128xf32>
    %101 = vector.shape_cast %100 : vector<1x1x8x128xf32> to vector<8x128xf32>
    %102 = vector.shape_cast %99 : vector<8x128xf32> to vector<1x1x8x128xf32>
    tpu.vector_store %arg6[%c0_86, %c2_87, %c0_88, %c0_89], %102 {strides = array<i32>} : memref<1x5x8x128xf32, #tpu.memory_space<vmem>>, vector<1x1x8x128xf32>,
    %c0_90 = arith.constant 0 : index
    %c2_91 = arith.constant 2 : index
    %c0_92 = arith.constant 0 : index
    %c0_93 = arith.constant 0 : index
    %103 = vector.load %arg7[%c0_90, %c2_91, %c0_92, %c0_93] : memref<1x5x8x128xf32, #tpu.memory_space<vmem>>, vector<1x1x8x128xf32>
    %104 = vector.shape_cast %103 : vector<1x1x8x128xf32> to vector<8x128xf32>
    %cst_94 = arith.constant 1.000000e+00 : f32
    %cst_95 = arith.constant 0.000000e+00 : f32
    %105 = vector.broadcast %cst_94 : f32 to vector<8x128xf32>
    %106 = vector.broadcast %cst_95 : f32 to vector<8x128xf32>
    %107 = arith.select %88, %105, %106 : vector<8x128xi1>, vector<8x128xf32>
    %108 = arith.addf %104, %107 : vector<8x128xf32>
    %c0_96 = arith.constant 0 : index
    %c2_97 = arith.constant 2 : index
    %c0_98 = arith.constant 0 : index
    %c0_99 = arith.constant 0 : index
    %109 = vector.load %arg7[%c0_96, %c2_97, %c0_98, %c0_99] : memref<1x5x8x128xf32, #tpu.memory_space<vmem>>, vector<1x1x8x128xf32>
    %110 = vector.shape_cast %109 : vector<1x1x8x128xf32> to vector<8x128xf32>
    %111 = vector.shape_cast %108 : vector<8x128xf32> to vector<1x1x8x128xf32>
    tpu.vector_store %arg7[%c0_96, %c2_97, %c0_98, %c0_99], %111 {strides = array<i32>} : memref<1x5x8x128xf32, #tpu.memory_space<vmem>>, vector<1x1x8x128xf32>,
    %112 = arith.mulf %26, %33 : vector<8x128xf32>
    %c3_i32 = arith.constant 3 : i32
    %113 = vector.broadcast %c3_i32 : i32 to vector<8x128xi32>
    %114 = arith.cmpi eq, %4, %113 : vector<8x128xi32>
    %c0_100 = arith.constant 0 : index
    %c3_101 = arith.constant 3 : index
    %c0_102 = arith.constant 0 : index
    %c0_103 = arith.constant 0 : index
    %115 = vector.load %arg5[%c0_100, %c3_101, %c0_102, %c0_103] : memref<1x5x8x128xf32, #tpu.memory_space<vmem>>, vector<1x1x8x128xf32>
    %116 = vector.shape_cast %115 : vector<1x1x8x128xf32> to vector<8x128xf32>
    %cst_104 = arith.constant 0.000000e+00 : f32
    %117 = vector.broadcast %cst_104 : f32 to vector<8x128xf32>
    %118 = arith.select %114, %112, %117 : vector<8x128xi1>, vector<8x128xf32>
    %119 = arith.addf %116, %118 : vector<8x128xf32>
    %c0_105 = arith.constant 0 : index
    %c3_106 = arith.constant 3 : index
    %c0_107 = arith.constant 0 : index
    %c0_108 = arith.constant 0 : index
    %120 = vector.load %arg5[%c0_105, %c3_106, %c0_107, %c0_108] : memref<1x5x8x128xf32, #tpu.memory_space<vmem>>, vector<1x1x8x128xf32>
    %121 = vector.shape_cast %120 : vector<1x1x8x128xf32> to vector<8x128xf32>
    %122 = vector.shape_cast %119 : vector<8x128xf32> to vector<1x1x8x128xf32>
    tpu.vector_store %arg5[%c0_105, %c3_106, %c0_107, %c0_108], %122 {strides = array<i32>} : memref<1x5x8x128xf32, #tpu.memory_space<vmem>>, vector<1x1x8x128xf32>,
    %c0_109 = arith.constant 0 : index
    %c3_110 = arith.constant 3 : index
    %c0_111 = arith.constant 0 : index
    %c0_112 = arith.constant 0 : index
    %123 = vector.load %arg6[%c0_109, %c3_110, %c0_111, %c0_112] : memref<1x5x8x128xf32, #tpu.memory_space<vmem>>, vector<1x1x8x128xf32>
    %124 = vector.shape_cast %123 : vector<1x1x8x128xf32> to vector<8x128xf32>
    %125 = arith.addf %124, %112 : vector<8x128xf32>
    %c0_113 = arith.constant 0 : index
    %c3_114 = arith.constant 3 : index
    %c0_115 = arith.constant 0 : index
    %c0_116 = arith.constant 0 : index
    %126 = vector.load %arg6[%c0_113, %c3_114, %c0_115, %c0_116] : memref<1x5x8x128xf32, #tpu.memory_space<vmem>>, vector<1x1x8x128xf32>
    %127 = vector.shape_cast %126 : vector<1x1x8x128xf32> to vector<8x128xf32>
    %128 = vector.shape_cast %125 : vector<8x128xf32> to vector<1x1x8x128xf32>
    tpu.vector_store %arg6[%c0_113, %c3_114, %c0_115, %c0_116], %128 {strides = array<i32>} : memref<1x5x8x128xf32, #tpu.memory_space<vmem>>, vector<1x1x8x128xf32>,
    %c0_117 = arith.constant 0 : index
    %c3_118 = arith.constant 3 : index
    %c0_119 = arith.constant 0 : index
    %c0_120 = arith.constant 0 : index
    %129 = vector.load %arg7[%c0_117, %c3_118, %c0_119, %c0_120] : memref<1x5x8x128xf32, #tpu.memory_space<vmem>>, vector<1x1x8x128xf32>
    %130 = vector.shape_cast %129 : vector<1x1x8x128xf32> to vector<8x128xf32>
    %cst_121 = arith.constant 1.000000e+00 : f32
    %cst_122 = arith.constant 0.000000e+00 : f32
    %131 = vector.broadcast %cst_121 : f32 to vector<8x128xf32>
    %132 = vector.broadcast %cst_122 : f32 to vector<8x128xf32>
    %133 = arith.select %114, %131, %132 : vector<8x128xi1>, vector<8x128xf32>
    %134 = arith.addf %130, %133 : vector<8x128xf32>
    %c0_123 = arith.constant 0 : index
    %c3_124 = arith.constant 3 : index
    %c0_125 = arith.constant 0 : index
    %c0_126 = arith.constant 0 : index
    %135 = vector.load %arg7[%c0_123, %c3_124, %c0_125, %c0_126] : memref<1x5x8x128xf32, #tpu.memory_space<vmem>>, vector<1x1x8x128xf32>
    %136 = vector.shape_cast %135 : vector<1x1x8x128xf32> to vector<8x128xf32>
    %137 = vector.shape_cast %134 : vector<8x128xf32> to vector<1x1x8x128xf32>
    tpu.vector_store %arg7[%c0_123, %c3_124, %c0_125, %c0_126], %137 {strides = array<i32>} : memref<1x5x8x128xf32, #tpu.memory_space<vmem>>, vector<1x1x8x128xf32>,
    %138 = arith.mulf %28, %33 : vector<8x128xf32>
    %c4_i32 = arith.constant 4 : i32
    %139 = vector.broadcast %c4_i32 : i32 to vector<8x128xi32>
    %140 = arith.cmpi eq, %4, %139 : vector<8x128xi32>
    %c0_127 = arith.constant 0 : index
    %c4_128 = arith.constant 4 : index
    %c0_129 = arith.constant 0 : index
    %c0_130 = arith.constant 0 : index
    %141 = vector.load %arg5[%c0_127, %c4_128, %c0_129, %c0_130] : memref<1x5x8x128xf32, #tpu.memory_space<vmem>>, vector<1x1x8x128xf32>
    %142 = vector.shape_cast %141 : vector<1x1x8x128xf32> to vector<8x128xf32>
    %cst_131 = arith.constant 0.000000e+00 : f32
    %143 = vector.broadcast %cst_131 : f32 to vector<8x128xf32>
    %144 = arith.select %140, %138, %143 : vector<8x128xi1>, vector<8x128xf32>
    %145 = arith.addf %142, %144 : vector<8x128xf32>
    %c0_132 = arith.constant 0 : index
    %c4_133 = arith.constant 4 : index
    %c0_134 = arith.constant 0 : index
    %c0_135 = arith.constant 0 : index
    %146 = vector.load %arg5[%c0_132, %c4_133, %c0_134, %c0_135] : memref<1x5x8x128xf32, #tpu.memory_space<vmem>>, vector<1x1x8x128xf32>
    %147 = vector.shape_cast %146 : vector<1x1x8x128xf32> to vector<8x128xf32>
    %148 = vector.shape_cast %145 : vector<8x128xf32> to vector<1x1x8x128xf32>
    tpu.vector_store %arg5[%c0_132, %c4_133, %c0_134, %c0_135], %148 {strides = array<i32>} : memref<1x5x8x128xf32, #tpu.memory_space<vmem>>, vector<1x1x8x128xf32>,
    %c0_136 = arith.constant 0 : index
    %c4_137 = arith.constant 4 : index
    %c0_138 = arith.constant 0 : index
    %c0_139 = arith.constant 0 : index
    %149 = vector.load %arg6[%c0_136, %c4_137, %c0_138, %c0_139] : memref<1x5x8x128xf32, #tpu.memory_space<vmem>>, vector<1x1x8x128xf32>
    %150 = vector.shape_cast %149 : vector<1x1x8x128xf32> to vector<8x128xf32>
    %151 = arith.addf %150, %138 : vector<8x128xf32>
    %c0_140 = arith.constant 0 : index
    %c4_141 = arith.constant 4 : index
    %c0_142 = arith.constant 0 : index
    %c0_143 = arith.constant 0 : index
    %152 = vector.load %arg6[%c0_140, %c4_141, %c0_142, %c0_143] : memref<1x5x8x128xf32, #tpu.memory_space<vmem>>, vector<1x1x8x128xf32>
    %153 = vector.shape_cast %152 : vector<1x1x8x128xf32> to vector<8x128xf32>
    %154 = vector.shape_cast %151 : vector<8x128xf32> to vector<1x1x8x128xf32>
    tpu.vector_store %arg6[%c0_140, %c4_141, %c0_142, %c0_143], %154 {strides = array<i32>} : memref<1x5x8x128xf32, #tpu.memory_space<vmem>>, vector<1x1x8x128xf32>,
    %c0_144 = arith.constant 0 : index
    %c4_145 = arith.constant 4 : index
    %c0_146 = arith.constant 0 : index
    %c0_147 = arith.constant 0 : index
    %155 = vector.load %arg7[%c0_144, %c4_145, %c0_146, %c0_147] : memref<1x5x8x128xf32, #tpu.memory_space<vmem>>, vector<1x1x8x128xf32>
    %156 = vector.shape_cast %155 : vector<1x1x8x128xf32> to vector<8x128xf32>
    %cst_148 = arith.constant 1.000000e+00 : f32
    %cst_149 = arith.constant 0.000000e+00 : f32
    %157 = vector.broadcast %cst_148 : f32 to vector<8x128xf32>
    %158 = vector.broadcast %cst_149 : f32 to vector<8x128xf32>
    %159 = arith.select %140, %157, %158 : vector<8x128xi1>, vector<8x128xf32>
    %160 = arith.addf %156, %159 : vector<8x128xf32>
    %c0_150 = arith.constant 0 : index
    %c4_151 = arith.constant 4 : index
    %c0_152 = arith.constant 0 : index
    %c0_153 = arith.constant 0 : index
    %161 = vector.load %arg7[%c0_150, %c4_151, %c0_152, %c0_153] : memref<1x5x8x128xf32, #tpu.memory_space<vmem>>, vector<1x1x8x128xf32>
    %162 = vector.shape_cast %161 : vector<1x1x8x128xf32> to vector<8x128xf32>
    %163 = vector.shape_cast %160 : vector<8x128xf32> to vector<1x1x8x128xf32>
    tpu.vector_store %arg7[%c0_150, %c4_151, %c0_152, %c0_153], %163 {strides = array<i32>} : memref<1x5x8x128xf32, #tpu.memory_space<vmem>>, vector<1x1x8x128xf32>,
    return
  }
  func.func @transform_0(%arg0: i32, %arg1: i32, %arg2: i32) -> (i32, i32, i32, i32) {
    %c1_i32 = arith.constant 1 : i32
    %0 = arith.muli %arg1, %c1_i32 : i32
    %1 = arith.addi %0, %arg2 : i32
    %c0_i32 = arith.constant 0 : i32
    %c0_i32_0 = arith.constant 0 : i32
    %c0_i32_1 = arith.constant 0 : i32
    return %arg0, %c0_i32, %1, %c0_i32_0 : i32, i32, i32, i32
  }
  func.func @transform_1(%arg0: i32, %arg1: i32, %arg2: i32) -> (i32, i32, i32) {
    %c1_i32 = arith.constant 1 : i32
    %0 = arith.muli %arg1, %c1_i32 : i32
    %1 = arith.addi %0, %arg2 : i32
    %c0_i32 = arith.constant 0 : i32
    %c0_i32_0 = arith.constant 0 : i32
    return %arg0, %1, %c0_i32 : i32, i32, i32
  }
  func.func @transform_2(%arg0: i32, %arg1: i32, %arg2: i32) -> (i32, i32, i32, i32) {
    %c1_i32 = arith.constant 1 : i32
    %0 = arith.muli %arg0, %c1_i32 : i32
    %1 = arith.addi %0, %arg1 : i32
    %c0_i32 = arith.constant 0 : i32
    %c0_i32_0 = arith.constant 0 : i32
    %c0_i32_1 = arith.constant 0 : i32
    %c0_i32_2 = arith.constant 0 : i32
    return %1, %c0_i32, %c0_i32_0, %c0_i32_1 : i32, i32, i32, i32
  }
  func.func @transform_3(%arg0: i32, %arg1: i32, %arg2: i32) -> (i32, i32, i32, i32) {
    %c1_i32 = arith.constant 1 : i32
    %0 = arith.muli %arg0, %c1_i32 : i32
    %1 = arith.addi %0, %arg1 : i32
    %c0_i32 = arith.constant 0 : i32
    %c0_i32_0 = arith.constant 0 : i32
    %c0_i32_1 = arith.constant 0 : i32
    %c0_i32_2 = arith.constant 0 : i32
    return %1, %c0_i32, %c0_i32_0, %c0_i32_1 : i32, i32, i32, i32
  }
  func.func @transform_4(%arg0: i32, %arg1: i32, %arg2: i32) -> (i32, i32, i32, i32) {
    %c1_i32 = arith.constant 1 : i32
    %0 = arith.muli %arg0, %c1_i32 : i32
    %1 = arith.addi %0, %arg1 : i32
    %c0_i32 = arith.constant 0 : i32
    %c0_i32_0 = arith.constant 0 : i32
    %c0_i32_1 = arith.constant 0 : i32
    %c0_i32_2 = arith.constant 0 : i32
    return %1, %c0_i32, %c0_i32_0, %c0_i32_1 : i32, i32, i32, i32
  }
}

</mosaic_0001>

<llo_original>
// kernel: tpu_custom_call.1
$region0: #{tpu_custom_call.1}
  #allocation0 [shape = 'u32[]', space=smem, size = 0x4, offset = 0x4, fixed_abs, tag = 'smem constant byte address 0x4 - core index']
  #allocation1 [shape = 'u32[144,128]{1,0:T(1,128)}', space=vmem, size = 0x12000, scoped, tag = 'internal scratch']
  %s0 = inlined_call_operand.hbm [shape: f32[2,5,8,128], index: 0, kind: input, shape index: {}]
  %s1 = inlined_call_operand.hbm [shape: s32[2,8,128], index: 1, kind: input, shape index: {}]
  %s2 = inlined_call_operand.hbm [shape: f32[2,5,8,128], index: 2, kind: output, shape index: {0}]
  %s3 = inlined_call_operand.hbm [shape: f32[2,5,8,128], index: 3, kind: output, shape index: {1}]
  %s4 = inlined_call_operand.hbm [shape: f32[2,5,8,128], index: 4, kind: output, shape index: {2}]
  %5 = xla_tuple %s2, %s3, %s4
  %s6 = sld [smem:[#allocation0]]
  $region69: #{tpu_custom_call.1} parent=0
    _
  %s8 = ssub.s32 1, %s6
  %s9 = scalar_select 0, %s8, %s6
  $region1: #{tpu_custom_call.1} parent=0
    #allocation2 [shape = 'u8[40960]{0}', space=vmem, size = 0xa000, scoped, tag = 'input window, operand 0']
    #allocation3 [shape = 's32[2]{0}', space=sflag, size = 0x8, scoped, tag = 'scoped memory for tpu_custom_call.1']
    #allocation4 [shape = 's32[2]{0}', space=sflag, size = 0x8, scoped, tag = 'scoped memory for tpu_custom_call.1']
    #allocation5 [shape = 'u8[8192]{0}', space=vmem, size = 0x2000, scoped, tag = 'input window, operand 1']
    #allocation6 [shape = 's32[2]{0}', space=sflag, size = 0x8, scoped, tag = 'scoped memory for tpu_custom_call.1']
    #allocation7 [shape = 'u8[40960]{0}', space=vmem, size = 0xa000, scoped, tag = 'output window, operand 0']
    #allocation8 [shape = 'u8[40960]{0}', space=vmem, size = 0xa000, scoped, tag = 'output window, operand 1']
    #allocation9 [shape = 's32[2]{0}', space=sflag, size = 0x8, scoped, tag = 'scoped memory for tpu_custom_call.1']
    #allocation10 [shape = 'u8[40960]{0}', space=vmem, size = 0xa000, scoped, tag = 'output window, operand 2']
    %10 = vsyncpa [#allocation3], 0
    %s11 = scalar_lea.sflag [#allocation3], 1
    %12 = vsyncpa %s11, 0
    %13 = vsyncpa [#allocation6], 0
    %s14 = scalar_lea.sflag [#allocation6], 1
    %15 = vsyncpa %s14, 0
    %16 = vsyncpa [#allocation4], 0
    %s17 = scalar_lea.sflag [#allocation4], 1
    %18 = vsyncpa %s17, 0
    %19 = vsyncpa [#allocation9], 0
    %s20 = scalar_lea.sflag [#allocation9], 1
    %21 = vsyncpa %s20, 0
    loop: start=0, step=1, limit=4
    $region2: #{tpu_custom_call.1} parent=1 // loop_pre_header
      _
    $region3: #{tpu_custom_call.1} parent=1 // loop_header
      %s23 = sphi 0, %s27
      %p24 = scmp.ge.s32.totalorder %s23, 4
      %s30 = sphi 0, %s49
      %s31 = sphi 0, %s45
      %s32 = sphi 0, %s41
      %s33 = sphi 0, %s30
      %s34 = sphi 0, %s31
      %s35 = sphi 0, %s32
      %s36 = sphi 0, %s33
      %s37 = sphi 0, %s34
      %s38 = sphi 0, %s35
      %s56 = sphi 0, %s58
      %s59 = sphi 0, %s56
      %s60 = sphi 0, %s59
      %s76 = sphi 0, %s60
      %s86 = sphi 0, %s88
      %s89 = sphi 0, %s86
      %s90 = sphi 0, %s89
      %s106 = sphi 0, %s90
      %s114 = sphi 0, %s116
      %s117 = sphi 0, %s114
      %s118 = sphi 0, %s117
      %s134 = sphi 0, %s118
      %s142 = sphi 0, %s144
      %s145 = sphi 0, %s142
      %s146 = sphi 0, %s145
      %s162 = sphi 0, %s146
      %s170 = sphi 0, %s172
      %s173 = sphi 0, %s170
      %s174 = sphi 0, %s173
      %s190 = sphi 0, %s174
    $region4: #{tpu_custom_call.1} parent=1 // loop_header_branch
      %26 = sbr.rel (%p24) target = $region8
    $region5: #{tpu_custom_call.1} parent=1 // loop_body
      %s28 = ssub.s32 %s23, 1
      %s29 = ssub.s32 %s23, 2
      %s39 = sadd.s32 1, %s32
      %p40 = scmp.ge.s32.totalorder %s39, 1
      %s41 = scalar_select %p40, 0, %s39
      %s42 = sadd.s32 1, %s31
      %s43 = scalar_select %p40, %s42, %s31
      %p44 = scmp.ge.s32.totalorder %s43, 1
      %s45 = scalar_select %p44, 0, %s43
      %s46 = sadd.s32 1, %s30
      %s47 = scalar_select %p44, %s46, %s30
      %p48 = scmp.ge.s32.totalorder %s47, 2
      %s49 = scalar_select %p48, 0, %s47
      %s50 = sadd.s32 %s31, %s32
      %s51 = sadd.s32 %s45, %s41
      %s52 = ssub.s32 %s30, %s49
      %s53 = ssub.s32 %s50, %s51
      %s54 = sor.u32 %s52, %s53
      %p55 = scmp.eq.s32.totalorder %s54, 0
      %s57 = sadd.s32 %s56, 1
      %s58 = scalar_select %p55, %s56, %s57
      %p61 = pneg %p55
      %p62 = scmp.eq.s32.totalorder %s23, 1
      %p63 = por %p61, %p62
      %p64 = scmp.ne.s32.totalorder %s56, %s59
      %p65 = scmp.eq.s32.totalorder %s23, 0
      %p66 = por %p64, %p65
      %p67 = scmp.ne.s32.totalorder %s56, %s59
      %p68 = scmp.eq.s32.totalorder %s28, 1
      %p69 = por %p67, %p68
      %p70 = scmp.ne.s32.totalorder %s59, %s60
      %p71 = scmp.eq.s32.totalorder %s28, 0
      %p72 = por %p70, %p71
      %p73 = scmp.ne.s32.totalorder %s59, %s60
      %p74 = scmp.eq.s32.totalorder %s29, 1
      %p75 = por %p73, %p74
      %p77 = scmp.ne.s32.totalorder %s60, %s76
      %p78 = scmp.eq.s32.totalorder %s29, 0
      %p79 = por %p77, %p78
      %s80 = sadd.s32 %s31, %s32
      %s81 = sadd.s32 %s45, %s41
      %s82 = ssub.s32 %s30, %s49
      %s83 = ssub.s32 %s80, %s81
      %s84 = sor.u32 %s82, %s83
      %p85 = scmp.eq.s32.totalorder %s84, 0
      %s87 = sadd.s32 %s86, 1
      %s88 = scalar_select %p85, %s86, %s87
      %p91 = pneg %p85
      %p92 = scmp.eq.s32.totalorder %s23, 1
      %p93 = por %p91, %p92
      %p94 = scmp.ne.s32.totalorder %s86, %s89
      %p95 = scmp.eq.s32.totalorder %s23, 0
      %p96 = por %p94, %p95
      %p97 = scmp.ne.s32.totalorder %s86, %s89
      %p98 = scmp.eq.s32.totalorder %s28, 1
      %p99 = por %p97, %p98
      %p100 = scmp.ne.s32.totalorder %s89, %s90
      %p101 = scmp.eq.s32.totalorder %s28, 0
      %p102 = por %p100, %p101
      %p103 = scmp.ne.s32.totalorder %s89, %s90
      %p104 = scmp.eq.s32.totalorder %s29, 1
      %p105 = por %p103, %p104
      %p107 = scmp.ne.s32.totalorder %s90, %s106
      %p108 = scmp.eq.s32.totalorder %s29, 0
      %p109 = por %p107, %p108
      %s110 = sadd.s32 %s30, %s31
      %s111 = sadd.s32 %s49, %s45
      %s112 = ssub.s32 %s110, %s111
      %p113 = scmp.eq.s32.totalorder %s112, 0
      %s115 = sadd.s32 %s114, 1
      %s116 = scalar_select %p113, %s114, %s115
      %p119 = pneg %p113
      %p120 = scmp.eq.s32.totalorder %s23, 1
      %p121 = por %p119, %p120
      %p122 = scmp.ne.s32.totalorder %s114, %s117
      %p123 = scmp.eq.s32.totalorder %s23, 0
      %p124 = por %p122, %p123
      %p125 = scmp.ne.s32.totalorder %s114, %s117
      %p126 = scmp.eq.s32.totalorder %s28, 1
      %p127 = por %p125, %p126
      %p128 = scmp.ne.s32.totalorder %s117, %s118
      %p129 = scmp.eq.s32.totalorder %s28, 0
      %p130 = por %p128, %p129
      %p131 = scmp.ne.s32.totalorder %s117, %s118
      %p132 = scmp.eq.s32.totalorder %s29, 1
      %p133 = por %p131, %p132
      %p135 = scmp.ne.s32.totalorder %s118, %s134
      %p136 = scmp.eq.s32.totalorder %s29, 0
      %p137 = por %p135, %p136
      %s138 = sadd.s32 %s30, %s31
      %s139 = sadd.s32 %s49, %s45
      %s140 = ssub.s32 %s138, %s139
      %p141 = scmp.eq.s32.totalorder %s140, 0
      %s143 = sadd.s32 %s142, 1
      %s144 = scalar_select %p141, %s142, %s143
      %p147 = pneg %p141
      %p148 = scmp.eq.s32.totalorder %s23, 1
      %p149 = por %p147, %p148
      %p150 = scmp.ne.s32.totalorder %s142, %s145
      %p151 = scmp.eq.s32.totalorder %s23, 0
      %p152 = por %p150, %p151
      %p153 = scmp.ne.s32.totalorder %s142, %s145
      %p154 = scmp.eq.s32.totalorder %s28, 1
      %p155 = por %p153, %p154
      %p156 = scmp.ne.s32.totalorder %s145, %s146
      %p157 = scmp.eq.s32.totalorder %s28, 0
      %p158 = por %p156, %p157
      %p159 = scmp.ne.s32.totalorder %s145, %s146
      %p160 = scmp.eq.s32.totalorder %s29, 1
      %p161 = por %p159, %p160
      %p163 = scmp.ne.s32.totalorder %s146, %s162
      %p164 = scmp.eq.s32.totalorder %s29, 0
      %p165 = por %p163, %p164
      %s166 = sadd.s32 %s30, %s31
      %s167 = sadd.s32 %s49, %s45
      %s168 = ssub.s32 %s166, %s167
      %p169 = scmp.eq.s32.totalorder %s168, 0
      %s171 = sadd.s32 %s170, 1
      %s172 = scalar_select %p169, %s170, %s171
      %p175 = pneg %p169
      %p176 = scmp.eq.s32.totalorder %s23, 1
      %p177 = por %p175, %p176
      %p178 = scmp.ne.s32.totalorder %s170, %s173
      %p179 = scmp.eq.s32.totalorder %s23, 0
      %p180 = por %p178, %p179
      %p181 = scmp.ne.s32.totalorder %s170, %s173
      %p182 = scmp.eq.s32.totalorder %s28, 1
      %p183 = por %p181, %p182
      %p184 = scmp.ne.s32.totalorder %s173, %s174
      %p185 = scmp.eq.s32.totalorder %s28, 0
      %p186 = por %p184, %p185
      %p187 = scmp.ne.s32.totalorder %s173, %s174
      %p188 = scmp.eq.s32.totalorder %s29, 1
      %p189 = por %p187, %p188
      %p191 = scmp.ne.s32.totalorder %s174, %s190
      %p192 = scmp.eq.s32.totalorder %s29, 0
      %p193 = por %p191, %p192
      %p194 = scmp.le.s32.totalorder 1, %s23
      %p195 = scmp.lt.s32.totalorder %s23, 3
      %p196 = pnand %p194, %p195
      %p197 = pneg %p196
      // Predicated region
      $region9: #{tpu_custom_call.1} parent=5 // pred_check
        _
      $region10: #{tpu_custom_call.1} parent=5 // pred_check_branch
        %199 = sbr.rel (%p196) target = $region12
      $region11: #{tpu_custom_call.1} parent=5 // pred_region
        %s200 = ssub.s32 %s23, 1
      $region12: #{tpu_custom_call.1} parent=5 // pred_fallthru
        _
      %p201 = scmp.lt.s32.totalorder %s23, 2
      // Predicated region
      $region13: #{tpu_custom_call.1} parent=5 // pred_check
        %p202 = pneg %p201
      $region14: #{tpu_custom_call.1} parent=5 // pred_check_branch
        %204 = sbr.rel (%p202) target = $region16
      $region15: #{tpu_custom_call.1} parent=5 // pred_region
        // Predicated region
        $region17: #{tpu_custom_call.1} parent=15 // pred_check
          %p205 = pneg %p66
        $region18: #{tpu_custom_call.1} parent=15 // pred_check_branch
          %207 = sbr.rel (%p205) target = $region20
        $region19: #{tpu_custom_call.1} parent=15 // pred_region
          %s208 = sand.u32 %s56, 1
          %s209 = scalar_lea.sflag [#allocation3], %s208
          %s210 = sand.u32 %s56, 1
          %s211 = smul.addr %s210, 40
          %s212 = scalar_lea.vmem [#allocation2], %s211
          %s213 = sadd.s32 %s31, %s32
          %s215 = ssub.s32 640, 640
          %216 = vsyncadd %s209, %s215
          %s217 = smul.addr %s30, 5
          %s218 = sadd.s32 %s213, %s217
          %s219 = smul.addr %s218, 128
          %s220 = scalar_lea.hbm %s0, %s219
          %s221 = sshll.u32 %s212, 4
          %s222 = int_to_ptr.vmem [resolvable:$true] %s221
          %227 = dma.hbm_to_vmem [thread:$0]  %s220, 640, %s222, %s209, 128, 128, 8
        $region20: #{tpu_custom_call.1} parent=15 // pred_fallthru
          _
        // Predicated region
        $region21: #{tpu_custom_call.1} parent=15 // pred_check
          %p228 = pneg %p96
        $region22: #{tpu_custom_call.1} parent=15 // pred_check_branch
          %230 = sbr.rel (%p228) target = $region24
        $region23: #{tpu_custom_call.1} parent=15 // pred_region
          %s231 = sand.u32 %s86, 1
          %s232 = scalar_lea.sflag [#allocation6], %s231
          %s233 = sand.u32 %s86, 1
          %s234 = smul.addr %s233, 8
          %s235 = scalar_lea.vmem [#allocation5], %s234
          %s236 = sadd.s32 %s31, %s32
          %s238 = ssub.s32 128, 128
          %239 = vsyncadd %s232, %s238
          %s240 = sadd.s32 %s236, %s30
          %s241 = smul.addr %s240, 128
          %s242 = scalar_lea.hbm %s1, %s241
          %s244 = sshll.u32 %s235, 4
          %s245 = int_to_ptr.vmem [resolvable:$true] %s244
          %247 = dma.hbm_to_vmem [thread:$0]  %s242, 128, %s245, %s232
        $region24: #{tpu_custom_call.1} parent=15 // pred_fallthru
          _
      $region16: #{tpu_custom_call.1} parent=5 // pred_fallthru
        _
      %p248 = scmp.le.s32.totalorder 1, %s23
      %p249 = scmp.lt.s32.totalorder %s23, 3
      %p250 = pnand %p248, %p249
      %p251 = pneg %p250
      // Predicated region
      $region25: #{tpu_custom_call.1} parent=5 // pred_check
        _
      $region26: #{tpu_custom_call.1} parent=5 // pred_check_branch
        %253 = sbr.rel (%p250) target = $region28
      $region27: #{tpu_custom_call.1} parent=5 // pred_region
        %s254 = ssub.s32 %s23, 1
        %s255 = sand.u32 %s59, 1
        %s256 = scalar_lea.sflag [#allocation3], %s255
        %s257 = sand.u32 %s59, 1
        %s258 = smul.addr %s257, 40
        %s259 = scalar_lea.vmem [#allocation2], %s258
        // Predicated region
        $region29: #{tpu_custom_call.1} parent=27 // pred_check
          %p260 = pneg %p72
        $region30: #{tpu_custom_call.1} parent=27 // pred_check_branch
          %262 = sbr.rel (%p260) target = $region32
        $region31: #{tpu_custom_call.1} parent=27 // pred_region
          %263 = dma.done %s256, 640
        $region32: #{tpu_custom_call.1} parent=27 // pred_fallthru
          _
        %s264 = sand.u32 %s89, 1
        %s265 = scalar_lea.sflag [#allocation6], %s264
        %s266 = sand.u32 %s89, 1
        %s267 = smul.addr %s266, 8
        %s268 = scalar_lea.vmem [#allocation5], %s267
        // Predicated region
        $region33: #{tpu_custom_call.1} parent=27 // pred_check
          %p269 = pneg %p102
        $region34: #{tpu_custom_call.1} parent=27 // pred_check_branch
          %271 = sbr.rel (%p269) target = $region36
        $region35: #{tpu_custom_call.1} parent=27 // pred_region
          %272 = dma.done %s265, 128
        $region36: #{tpu_custom_call.1} parent=27 // pred_fallthru
          _
        %s273 = sand.u32 %s59, 1
        %s274 = scalar_lea.sflag [#allocation3], %s273
        %s275 = sand.u32 %s59, 1
        %s276 = smul.addr %s275, 40
        %s277 = scalar_lea.vmem [#allocation2], %s276
        %p278 = pneg %p72
        %p279 = pneg %p69
        %s280 = sand.u32 %s89, 1
        %s281 = scalar_lea.sflag [#allocation6], %s280
        %s282 = sand.u32 %s89, 1
        %s283 = smul.addr %s282, 8
        %s284 = scalar_lea.vmem [#allocation5], %s283
        %p285 = pneg %p102
        %p286 = pneg %p99
        %p287 = pneg %p130
        %p288 = pneg %p127
        %s289 = sand.u32 %s117, 1
        %s290 = scalar_lea.sflag [#allocation4], %s289
        %s291 = sand.u32 %s117, 1
        %s292 = smul.addr %s291, 40
        %s293 = scalar_lea.vmem [#allocation7], %s292
        %p294 = pneg %p158
        %p295 = pneg %p155
        %s296 = sand.u32 %s28, 1
        %s297 = scalar_lea.sflag [#allocation9], %s296
        %s298 = sand.u32 %s145, 1
        %s299 = smul.addr %s298, 40
        %s300 = scalar_lea.vmem [#allocation8], %s299
        %p301 = pneg %p186
        %p302 = pneg %p183
        %s303 = sand.u32 %s28, 1
        %s304 = scalar_lea.sflag [#allocation9], %s303
        %s305 = sand.u32 %s173, 1
        %s306 = smul.addr %s305, 40
        %s307 = scalar_lea.vmem [#allocation10], %s306
        %s308 = sadd.s32 %s34, %s35
        %s309 = sadd.s32 %s34, %s35
        %s310 = sadd.s32 %s33, %s34
        %s311 = sadd.s32 %s33, %s34
        %s312 = sadd.s32 %s33, %s34
        %p313 = scmp.eq.s32.totalorder %s35, 0
        // Predicated region
        $region37: #{tpu_custom_call.1} parent=27 // pred_check
          %p314 = pneg %p313
        $region38: #{tpu_custom_call.1} parent=27 // pred_check_branch
          %316 = sbr.rel (%p314) target = $region40
        $region39: #{tpu_custom_call.1} parent=27 // pred_region
          %317 = vst [vmem:[%s293] sm:$0xff] 0.0
          %318 = vst [vmem:[%s293 + $0x8] sm:$0xff] 0.0
          %319 = vst [vmem:[%s293 + $0x10] sm:$0xff] 0.0
          %320 = vst [vmem:[%s293 + $0x18] sm:$0xff] 0.0
          %321 = vst [vmem:[%s293 + $0x20] sm:$0xff] 0.0
          %322 = vst [vmem:[%s300] sm:$0xff] 0.0
          %323 = vst [vmem:[%s300 + $0x8] sm:$0xff] 0.0
          %324 = vst [vmem:[%s300 + $0x10] sm:$0xff] 0.0
          %325 = vst [vmem:[%s300 + $0x18] sm:$0xff] 0.0
          %326 = vst [vmem:[%s300 + $0x20] sm:$0xff] 0.0
          %327 = vst [vmem:[%s307] sm:$0xff] 0.0
          %328 = vst [vmem:[%s307 + $0x8] sm:$0xff] 0.0
          %329 = vst [vmem:[%s307 + $0x10] sm:$0xff] 0.0
          %330 = vst [vmem:[%s307 + $0x18] sm:$0xff] 0.0
          %331 = vst [vmem:[%s307 + $0x20] sm:$0xff] 0.0
        $region40: #{tpu_custom_call.1} parent=27 // pred_fallthru
          _
        %v332 = vld [vmem:[%s268] sm:$0xff]
        %v333 = vld [vmem:[%s259] sm:$0xff]
        %s334 = scalar_lea.vmem %s259, 8 [#allocation2]
        %v335 = vld [vmem:[%s334] sm:$0xff]
        %s336 = scalar_lea.vmem %s259, 16 [#allocation2]
        %v337 = vld [vmem:[%s336] sm:$0xff]
        %s338 = scalar_lea.vmem %s259, 24 [#allocation2]
        %v339 = vld [vmem:[%s338] sm:$0xff]
        %s340 = scalar_lea.vmem %s259, 32 [#allocation2]
        %v341 = vld [vmem:[%s340] sm:$0xff]
        %v342 = vmax.f32 %v333, %v335
        %v343 = vmax.f32 %v342, %v337
        %v344 = vmax.f32 %v343, %v339
        %v345 = vmax.f32 %v344, %v341
        %v346 = vsub.f32 %v333, %v345
        %v347 = vmul.f32 %v346, 1.442695
        %v348 = vpow.pop %v347
        %v349 = vsub.f32 %v335, %v345
        %v350 = vmul.f32 %v349, 1.442695
        %v351 = vpow.pop %v350
        %v352 = vsub.f32 %v337, %v345
        %v353 = vmul.f32 %v352, 1.442695
        %v354 = vpow.pop %v353
        %v355 = vsub.f32 %v339, %v345
        %v356 = vmul.f32 %v355, 1.442695
        %v357 = vpow.pop %v356
        %v358 = vsub.f32 %v341, %v345
        %v359 = vmul.f32 %v358, 1.442695
        %v360 = vpow.pop %v359
        %v361 = vadd.f32 %v348, %v351
        %v362 = vadd.f32 %v361, %v354
        %v363 = vadd.f32 %v362, %v357
        %v364 = vadd.f32 %v363, %v360
        %v365 = vrcp.pop %v364
        %v366 = vmul.f32 %v348, %v365
        %vm367 = vcmp.eq.s32.totalorder %v332, 0
        %v368 = vld [vmem:[%s293] sm:$0xff]
        %v369 = vsel %vm367, %v366, 0.0
        %v370 = vadd.f32 %v368, %v369
        %371 = vst [vmem:[%s293] sm:$0xff] %v370
        %v372 = vld [vmem:[%s300] sm:$0xff]
        %v373 = vadd.f32 %v372, %v366
        %374 = vst [vmem:[%s300] sm:$0xff] %v373
        %v375 = vld [vmem:[%s307] sm:$0xff]
        %v376 = vsel %vm367, 1.0, 0.0
        %v377 = vadd.f32 %v375, %v376
        %378 = vst [vmem:[%s307] sm:$0xff] %v377
        %v379 = vmul.f32 %v351, %v365
        %vm380 = vcmp.eq.s32.totalorder %v332, 1
        %s381 = scalar_lea.vmem %s293, 8 [#allocation7]
        %v382 = vld [vmem:[%s381] sm:$0xff]
        %v383 = vsel %vm380, %v379, 0.0
        %v384 = vadd.f32 %v382, %v383
        %385 = vst [vmem:[%s381] sm:$0xff] %v384
        %s386 = scalar_lea.vmem %s300, 8 [#allocation8]
        %v387 = vld [vmem:[%s386] sm:$0xff]
        %v388 = vadd.f32 %v387, %v379
        %389 = vst [vmem:[%s386] sm:$0xff] %v388
        %s390 = scalar_lea.vmem %s307, 8 [#allocation10]
        %v391 = vld [vmem:[%s390] sm:$0xff]
        %v392 = vsel %vm380, 1.0, 0.0
        %v393 = vadd.f32 %v391, %v392
        %394 = vst [vmem:[%s390] sm:$0xff] %v393
        %v395 = vmul.f32 %v354, %v365
        %vm396 = vcmp.eq.s32.totalorder %v332, 2
        %s397 = scalar_lea.vmem %s293, 16 [#allocation7]
        %v398 = vld [vmem:[%s397] sm:$0xff]
        %v399 = vsel %vm396, %v395, 0.0
        %v400 = vadd.f32 %v398, %v399
        %401 = vst [vmem:[%s397] sm:$0xff] %v400
        %s402 = scalar_lea.vmem %s300, 16 [#allocation8]
        %v403 = vld [vmem:[%s402] sm:$0xff]
        %v404 = vadd.f32 %v403, %v395
        %405 = vst [vmem:[%s402] sm:$0xff] %v404
        %s406 = scalar_lea.vmem %s307, 16 [#allocation10]
        %v407 = vld [vmem:[%s406] sm:$0xff]
        %v408 = vsel %vm396, 1.0, 0.0
        %v409 = vadd.f32 %v407, %v408
        %410 = vst [vmem:[%s406] sm:$0xff] %v409
        %v411 = vmul.f32 %v357, %v365
        %vm412 = vcmp.eq.s32.totalorder %v332, 3
        %s413 = scalar_lea.vmem %s293, 24 [#allocation7]
        %v414 = vld [vmem:[%s413] sm:$0xff]
        %v415 = vsel %vm412, %v411, 0.0
        %v416 = vadd.f32 %v414, %v415
        %417 = vst [vmem:[%s413] sm:$0xff] %v416
        %s418 = scalar_lea.vmem %s300, 24 [#allocation8]
        %v419 = vld [vmem:[%s418] sm:$0xff]
        %v420 = vadd.f32 %v419, %v411
        %421 = vst [vmem:[%s418] sm:$0xff] %v420
        %s422 = scalar_lea.vmem %s307, 24 [#allocation10]
        %v423 = vld [vmem:[%s422] sm:$0xff]
        %v424 = vsel %vm412, 1.0, 0.0
        %v425 = vadd.f32 %v423, %v424
        %426 = vst [vmem:[%s422] sm:$0xff] %v425
        %v427 = vmul.f32 %v360, %v365
        %vm428 = vcmp.eq.s32.totalorder %v332, 4
        %s429 = scalar_lea.vmem %s293, 32 [#allocation7]
        %v430 = vld [vmem:[%s429] sm:$0xff]
        %v431 = vsel %vm428, %v427, 0.0
        %v432 = vadd.f32 %v430, %v431
        %433 = vst [vmem:[%s429] sm:$0xff] %v432
        %s434 = scalar_lea.vmem %s300, 32 [#allocation8]
        %v435 = vld [vmem:[%s434] sm:$0xff]
        %v436 = vadd.f32 %v435, %v427
        %437 = vst [vmem:[%s434] sm:$0xff] %v436
        %s438 = scalar_lea.vmem %s307, 32 [#allocation10]
        %v439 = vld [vmem:[%s438] sm:$0xff]
        %v440 = vsel %vm428, 1.0, 0.0
        %v441 = vadd.f32 %v439, %v440
        %442 = vst [vmem:[%s438] sm:$0xff] %v441
        %s443 = sand.u32 %s117, 1
        %s444 = scalar_lea.sflag [#allocation4], %s443
        %s445 = sand.u32 %s117, 1
        %s446 = smul.addr %s445, 40
        %s447 = scalar_lea.vmem [#allocation7], %s446
        %s448 = sand.u32 %s28, 1
        %s449 = scalar_lea.sflag [#allocation9], %s448
        %s450 = sand.u32 %s145, 1
        %s451 = smul.addr %s450, 40
        %s452 = scalar_lea.vmem [#allocation8], %s451
        %s453 = sand.u32 %s28, 1
        %s454 = scalar_lea.sflag [#allocation9], %s453
        %s455 = sand.u32 %s173, 1
        %s456 = smul.addr %s455, 40
        %s457 = scalar_lea.vmem [#allocation10], %s456
        // Predicated region
        $region41: #{tpu_custom_call.1} parent=27 // pred_check
          %p458 = pneg %p127
        $region42: #{tpu_custom_call.1} parent=27 // pred_check_branch
          %460 = sbr.rel (%p458) target = $region44
        $region43: #{tpu_custom_call.1} parent=27 // pred_region
          %s461 = sadd.s32 %s33, %s34
          %s463 = ssub.s32 640, 640
          %464 = vsyncadd %s444, %s463
          %s465 = smul.addr %s461, 5
          %s466 = smul.addr %s465, 128
          %s467 = scalar_lea.hbm %s2, %s466
          %s468 = sshll.u32 %s447, 4
          %s469 = int_to_ptr.vmem [resolvable:$true] %s468
          %474 = dma.vmem_to_hbm [thread:$0]  %s469, 640, %s467, %s444, 128, 128, 8
        $region44: #{tpu_custom_call.1} parent=27 // pred_fallthru
          _
        // Predicated region
        $region45: #{tpu_custom_call.1} parent=27 // pred_check
          %p475 = pneg %p155
        $region46: #{tpu_custom_call.1} parent=27 // pred_check_branch
          %477 = sbr.rel (%p475) target = $region48
        $region47: #{tpu_custom_call.1} parent=27 // pred_region
          %s478 = sadd.s32 %s33, %s34
          %s480 = ssub.s32 640, 640
          %481 = vsyncadd %s449, %s480
          %s482 = smul.addr %s478, 5
          %s483 = smul.addr %s482, 128
          %s484 = scalar_lea.hbm %s3, %s483
          %s485 = sshll.u32 %s452, 4
          %s486 = int_to_ptr.vmem [resolvable:$true] %s485
          %491 = dma.vmem_to_hbm [thread:$0]  %s486, 640, %s484, %s449, 128, 128, 8
        $region48: #{tpu_custom_call.1} parent=27 // pred_fallthru
          _
        // Predicated region
        $region49: #{tpu_custom_call.1} parent=27 // pred_check
          %p492 = pneg %p183
        $region50: #{tpu_custom_call.1} parent=27 // pred_check_branch
          %494 = sbr.rel (%p492) target = $region52
        $region51: #{tpu_custom_call.1} parent=27 // pred_region
          %s495 = sadd.s32 %s33, %s34
          %s497 = ssub.s32 640, 640
          %498 = vsyncadd %s454, %s497
          %s499 = smul.addr %s495, 5
          %s500 = smul.addr %s499, 128
          %s501 = scalar_lea.hbm %s4, %s500
          %s502 = sshll.u32 %s457, 4
          %s503 = int_to_ptr.vmem [resolvable:$true] %s502
          %508 = dma.vmem_to_hbm [thread:$0]  %s503, 640, %s501, %s454, 128, 128, 8
        $region52: #{tpu_custom_call.1} parent=27 // pred_fallthru
          _
      $region28: #{tpu_custom_call.1} parent=5 // pred_fallthru
        _
      %p509 = scmp.le.s32.totalorder 2, %s23
      // Predicated region
      $region53: #{tpu_custom_call.1} parent=5 // pred_check
        %p510 = pneg %p509
      $region54: #{tpu_custom_call.1} parent=5 // pred_check_branch
        %512 = sbr.rel (%p510) target = $region56
      $region55: #{tpu_custom_call.1} parent=5 // pred_region
        %s513 = ssub.s32 %s23, 2
        // Predicated region
        $region57: #{tpu_custom_call.1} parent=55 // pred_check
          %p514 = pneg %p133
        $region58: #{tpu_custom_call.1} parent=55 // pred_check_branch
          %516 = sbr.rel (%p514) target = $region60
        $region59: #{tpu_custom_call.1} parent=55 // pred_region
          %s517 = sand.u32 %s118, 1
          %s518 = scalar_lea.sflag [#allocation4], %s517
          %s519 = sand.u32 %s118, 1
          %s520 = smul.addr %s519, 40
          %s521 = scalar_lea.vmem [#allocation7], %s520
          %522 = dma.done %s518, 640
        $region60: #{tpu_custom_call.1} parent=55 // pred_fallthru
          _
        // Predicated region
        $region61: #{tpu_custom_call.1} parent=55 // pred_check
          %p523 = pneg %p161
        $region62: #{tpu_custom_call.1} parent=55 // pred_check_branch
          %525 = sbr.rel (%p523) target = $region64
        $region63: #{tpu_custom_call.1} parent=55 // pred_region
          %s526 = sand.u32 %s29, 1
          %s527 = scalar_lea.sflag [#allocation9], %s526
          %s528 = sand.u32 %s146, 1
          %s529 = smul.addr %s528, 40
          %s530 = scalar_lea.vmem [#allocation8], %s529
          %531 = dma.done %s527, 640
        $region64: #{tpu_custom_call.1} parent=55 // pred_fallthru
          _
        // Predicated region
        $region65: #{tpu_custom_call.1} parent=55 // pred_check
          %p532 = pneg %p189
        $region66: #{tpu_custom_call.1} parent=55 // pred_check_branch
          %534 = sbr.rel (%p532) target = $region68
        $region67: #{tpu_custom_call.1} parent=55 // pred_region
          %s535 = sand.u32 %s29, 1
          %s536 = scalar_lea.sflag [#allocation9], %s535
          %s537 = sand.u32 %s174, 1
          %s538 = smul.addr %s537, 40
          %s539 = scalar_lea.vmem [#allocation10], %s538
          %540 = dma.done %s536, 640
        $region68: #{tpu_custom_call.1} parent=55 // pred_fallthru
          _
      $region56: #{tpu_custom_call.1} parent=5 // pred_fallthru
        _
    $region6: #{tpu_custom_call.1} parent=1 // loop_footer
      %s27 = sadd.s32 1, %s23
    $region7: #{tpu_custom_call.1} parent=1 // loop_footer_branch
      %22 = sbr.rel target = $region3
    $region8: #{tpu_custom_call.1} parent=1 // loop_exit
      _
    %541 = vsyncpa [#allocation3], 1
    %s542 = scalar_lea.sflag [#allocation3], 1
    %543 = vsyncpa %s542, 1
    %544 = vsyncpa [#allocation6], 1
    %s545 = scalar_lea.sflag [#allocation6], 1
    %546 = vsyncpa %s545, 1
    %547 = vsyncpa [#allocation4], 1
    %s548 = scalar_lea.sflag [#allocation4], 1
    %549 = vsyncpa %s548, 1
    %550 = vsyncpa [#allocation9], 1
    %s551 = scalar_lea.sflag [#allocation9], 1
    %552 = vsyncpa %s551, 1

</llo_original>
